<compile_context>
chip_gen: v7x
topology: tpu7x:2x2x1
jax: 0.10.0
libtpu: 0.0.40
codegen_flags: <defaults>
</compile_context>

<pallas_src>
import jax
import jax.numpy as jnp
from jax.experimental import pallas as pl
from jax.experimental.pallas import tpu as pltpu


def _round_up(x: int, m: int) -> int:
    return (x + m - 1) // m * m


def _embed_gather_kernel(labels_ref, table_hbm, out_ref, sem):
    # labels_ref : SMEM (Bp,) int32      -- full label vector (tiny).
    # table_hbm  : HBM  (rows, Hp)       -- embedding table, never fully read.
    # out_ref    : VMEM (TB, Hp)         -- one sublane/lane-dense output tile.
    # sem        : DMA semaphores (nsem,) -- ring of in-flight row copies.
    tb = out_ref.shape[0]
    nsem = sem.shape[0]                      # power of two, nsem <= tb
    base = pl.program_id(0) * tb

    def _row_copy(src_row, dst_row, slot):
        # (1, Hp) HBM -> VMEM row copy descriptor.
        return pltpu.make_async_copy(
            table_hbm.at[pl.ds(src_row, 1), :],
            out_ref.at[pl.ds(dst_row, 1), :],
            sem.at[slot],
        )

    def _wait_slot(slot):
        # Waits only need matching transfer size; use static row 0 refs.
        _row_copy(0, 0, slot).wait()

    def body(r, carry):
        slot = r & (nsem - 1)

        # Reclaim this slot from the copy issued `nsem` rows ago.
        @pl.when(r >= nsem)
        def _():
            _wait_slot(slot)

        # Like nn.Embedding, an out-of-range label is undefined behaviour.
        idx = labels_ref[base + r]
        _row_copy(idx, r, slot).start()
        return carry

    jax.lax.fori_loop(0, tb, body, 0, unroll=8)

    # Drain: each slot has exactly one outstanding copy left.
    def drain(i, carry):
        _wait_slot(i)
        return carry

    jax.lax.fori_loop(0, nsem, drain, 0, unroll=True)


def label_embed_pallas(table_padded: jax.Array, labels: jax.Array, *,
                       hidden_size: int, tile_b: int = 256) -> jax.Array:
    """Row-gather of `table_padded` at `labels` (== nn.Embedding forward)."""
    B = labels.shape[0]
    rows, Hp = table_padded.shape

    # Sublane-dense output tiles: TB is a multiple of 8 (f32 sublane packing).
    TB = min(_round_up(tile_b, 8), _round_up(B, 8))
    Bp = _round_up(B, TB)
    if Bp == B:
        labels_p = labels.astype(jnp.int32)
    else:
        # Padded rows gather table row 0; they are sliced off below.
        labels_p = jnp.zeros((Bp,), jnp.int32).at[:B].set(labels.astype(jnp.int32))

    nsem = min(16, TB)  # TB >= 8, so nsem in {8, 16}: power of two.

    # VMEM budget: only the double-buffered output tile (table stays in HBM).
    itemsize = jnp.dtype(table_padded.dtype).itemsize
    vmem_needed = 2 * TB * Hp * itemsize + (1 << 20)  # +1 MiB compiler headroom
    # Raise the scoped limit only when we exceed the smallest default (16 MiB
    # on v5e); the gather design normally stays far below it on all chips.
    vmem_limit = vmem_needed if vmem_needed > (12 << 20) else None

    out = pl.pallas_call(
        _embed_gather_kernel,
        out_shape=jax.ShapeDtypeStruct((Bp, Hp), table_padded.dtype),
        grid_spec=pltpu.PrefetchScalarGridSpec(
            num_scalar_prefetch=0,
            grid=(Bp // TB,),
            in_specs=[
                # Full label vector in SMEM (scalar-indexed in the body).
                pl.BlockSpec(memory_space=pltpu.MemorySpace.SMEM),
                # Table stays in HBM; rows are gathered with manual DMA.
                pl.BlockSpec(memory_space=pl.ANY),
            ],
            out_specs=pl.BlockSpec((TB, Hp), lambda i: (i, 0)),
            scratch_shapes=[pltpu.SemaphoreType.DMA((nsem,))],
        ),
        compiler_params=pltpu.CompilerParams(
            # Each core gathers only its own rows -> no duplicated table DMA,
            # so sharding the batch-tile axis across v7x's two TCs is safe.
            dimension_semantics=("parallel",),
            vmem_limit_bytes=vmem_limit,
        ),
    )(labels_p, table_padded)

    # Skip the extra HBM round trip when no padding was actually needed.
    if Bp == B and Hp == hidden_size:
        return out
    return out[:B, :hidden_size]


class LabelEmbedder:
    """JAX/Pallas port of the PyTorch LabelEmbedder module."""

    def __init__(self, num_classes: int, hidden_size: int, dropout_prob: float,
                 key: jax.Array):
        use_cfg_embedding = int(dropout_prob > 0)
        rows = num_classes + use_cfg_embedding
        # nn.Embedding default init is N(0, 1); deterministic via `key`.
        self.embedding_table = jax.random.normal(
            key, (rows, hidden_size), dtype=jnp.float32)
        # Lane-dense copy for the kernel: hidden padded to a multiple of 128.
        hp = _round_up(hidden_size, 128)
        if hp == hidden_size:
            self._table_padded = self.embedding_table
        else:
            self._table_padded = (
                jnp.zeros((rows, hp), jnp.float32).at[:, :hidden_size]
                .set(self.embedding_table))
        self.num_classes = num_classes
        self.hidden_size = hidden_size
        self.dropout_prob = dropout_prob

    def token_drop(self, labels, rng=None, force_drop_ids=None):
        if force_drop_ids is None:
            drop_ids = jax.random.uniform(rng, (labels.shape[0],)) < self.dropout_prob
        else:
            drop_ids = force_drop_ids == 1
        return jnp.where(drop_ids, self.num_classes, labels)

    def __call__(self, labels, train: bool, rng=None, force_drop_ids=None):
        use_dropout = self.dropout_prob > 0
        if (train and use_dropout) or (force_drop_ids is not None):
            labels = self.token_drop(labels, rng, force_drop_ids)
        return label_embed_pallas(self._table_padded, labels,
                                  hidden_size=self.hidden_size)


if __name__ == "__main__":
    key = jax.random.PRNGKey(0)
    k_table, k_labels, k_drop = jax.random.split(key, 3)

    num_classes = 10
    hidden_size = 32
    dropout_prob = 0.1
    batch = 8

    embedder = LabelEmbedder(num_classes, hidden_size, dropout_prob, k_table)
    labels = jax.random.randint(k_labels, (batch,), 0, num_classes, dtype=jnp.int32)

    # Eval path (no dropout) — pure embedding lookup through the Pallas kernel.
    out_eval = jax.block_until_ready(embedder(labels, train=False))

    # CFG path with forced drops (deterministic): dropped rows use index num_classes.
    force_drop_ids = (jnp.arange(batch) % 2).astype(jnp.int32)
    out_cfg = jax.block_until_ready(
        embedder(labels, train=False, force_drop_ids=force_drop_ids))

    # Silent correctness checks against plain JAX gather on the unpadded table.
    ref_eval = jnp.take(embedder.embedding_table, labels, axis=0)
    dropped = jnp.where(force_drop_ids == 1, num_classes, labels)
    ref_cfg = jnp.take(embedder.embedding_table, dropped, axis=0)
    assert out_eval.shape == (batch, hidden_size)
    assert out_cfg.shape == (batch, hidden_size)
    assert jnp.allclose(out_eval, ref_eval)
    assert jnp.allclose(out_cfg, ref_cfg)

    print("KERNEL_OK")
</pallas_src>

<mosaic_0001>
module attributes {stable_mosaic.version = 11 : i64} {
  func.func @_embed_gather_kernel(%arg0: i32, %arg1: memref<8xi32, #tpu.memory_space<smem>>, %arg2: memref<11x128xf32, #tpu.memory_space<any>>, %arg3: memref<8x128xf32, #tpu.memory_space<vmem>>, %arg4: memref<8x!tpu.dma_semaphore, #tpu.memory_space<semaphore_mem>>) attributes {dimension_semantics = [#tpu.dimension_semantics<parallel>], iteration_bounds = array<i64: 1>, scalar_prefetch = 0 : i64, scratch_operands = 1 : i64, tpu.core_type = #tpu.core_type<tc>, window_params = [{transform_indices = @transform_0, window_bounds = array<i64: 8>}, {}, {transform_indices = @transform_2, window_bounds = array<i64: 8, 128>}]} {
    %c8_i32 = arith.constant 8 : i32
    %0 = arith.muli %arg0, %c8_i32 : i32
    %c0_i32 = arith.constant 0 : i32
    %c7_i32 = arith.constant 7 : i32
    %1 = arith.andi %c0_i32, %c7_i32 : i32
    %c8_i32_0 = arith.constant 8 : i32
    %2 = arith.cmpi sge, %c0_i32, %c8_i32_0 : i32
    %3 = arith.extui %2 : i1 to i32
    %c0_i32_1 = arith.constant 0 : i32
    %4 = arith.cmpi ne, %3, %c0_i32_1 : i32
    scf.if %4 {
      %c0_i32_82 = arith.constant 0 : i32
      %c0_i32_83 = arith.constant 0 : i32
      %121 = tpu.memref_slice %arg2[%c0_i32_82, %c0_i32_83] : memref<11x128xf32, #tpu.memory_space<any>> -> memref<1x128xf32, #tpu.memory_space<any>>
      %c0_i32_84 = arith.constant 0 : i32
      %c0_i32_85 = arith.constant 0 : i32
      %122 = tpu.memref_slice %arg3[%c0_i32_84, %c0_i32_85] : memref<8x128xf32, #tpu.memory_space<vmem>> -> memref<1x128xf32, #tpu.memory_space<vmem>>
      %123 = tpu.memref_slice %arg4[%1] : memref<8x!tpu.dma_semaphore, #tpu.memory_space<semaphore_mem>> -> memref<1x!tpu.dma_semaphore, #tpu.memory_space<semaphore_mem>>
      %124 = tpu.memref_squeeze %123 : memref<1x!tpu.dma_semaphore, #tpu.memory_space<semaphore_mem>> -> memref<!tpu.dma_semaphore, #tpu.memory_space<semaphore_mem>>
      tpu.wait_dma2 semaphore(%124 : memref<!tpu.dma_semaphore, #tpu.memory_space<semaphore_mem>>) src(%121 : memref<1x128xf32, #tpu.memory_space<any>>) dst(%122 : memref<1x128xf32, #tpu.memory_space<vmem>>)
    } else {
    }
    %5 = arith.addi %0, %c0_i32 : i32
    %6 = arith.index_cast %5 : i32 to index
    %7 = memref.load %arg1[%6] : memref<8xi32, #tpu.memory_space<smem>>
    %c0_i32_2 = arith.constant 0 : i32
    %8 = tpu.memref_slice %arg2[%7, %c0_i32_2] : memref<11x128xf32, #tpu.memory_space<any>> -> memref<1x128xf32, #tpu.memory_space<any>>
    %c0_i32_3 = arith.constant 0 : i32
    %9 = tpu.memref_slice %arg3[%c0_i32, %c0_i32_3] : memref<8x128xf32, #tpu.memory_space<vmem>> -> memref<1x128xf32, #tpu.memory_space<vmem>>
    %10 = tpu.memref_slice %arg4[%1] : memref<8x!tpu.dma_semaphore, #tpu.memory_space<semaphore_mem>> -> memref<1x!tpu.dma_semaphore, #tpu.memory_space<semaphore_mem>>
    %11 = tpu.memref_squeeze %10 : memref<1x!tpu.dma_semaphore, #tpu.memory_space<semaphore_mem>> -> memref<!tpu.dma_semaphore, #tpu.memory_space<semaphore_mem>>
    tpu.enqueue_dma source(%8 : memref<1x128xf32, #tpu.memory_space<any>>) target(%9 : memref<1x128xf32, #tpu.memory_space<vmem>>) target_semaphore(%11 : memref<!tpu.dma_semaphore, #tpu.memory_space<semaphore_mem>>)
    %c1_i32 = arith.constant 1 : i32
    %c7_i32_4 = arith.constant 7 : i32
    %12 = arith.andi %c1_i32, %c7_i32_4 : i32
    %c8_i32_5 = arith.constant 8 : i32
    %13 = arith.cmpi sge, %c1_i32, %c8_i32_5 : i32
    %14 = arith.extui %13 : i1 to i32
    %c0_i32_6 = arith.constant 0 : i32
    %15 = arith.cmpi ne, %14, %c0_i32_6 : i32
    scf.if %15 {
      %c0_i32_82 = arith.constant 0 : i32
      %c0_i32_83 = arith.constant 0 : i32
      %121 = tpu.memref_slice %arg2[%c0_i32_82, %c0_i32_83] : memref<11x128xf32, #tpu.memory_space<any>> -> memref<1x128xf32, #tpu.memory_space<any>>
      %c0_i32_84 = arith.constant 0 : i32
      %c0_i32_85 = arith.constant 0 : i32
      %122 = tpu.memref_slice %arg3[%c0_i32_84, %c0_i32_85] : memref<8x128xf32, #tpu.memory_space<vmem>> -> memref<1x128xf32, #tpu.memory_space<vmem>>
      %123 = tpu.memref_slice %arg4[%12] : memref<8x!tpu.dma_semaphore, #tpu.memory_space<semaphore_mem>> -> memref<1x!tpu.dma_semaphore, #tpu.memory_space<semaphore_mem>>
      %124 = tpu.memref_squeeze %123 : memref<1x!tpu.dma_semaphore, #tpu.memory_space<semaphore_mem>> -> memref<!tpu.dma_semaphore, #tpu.memory_space<semaphore_mem>>
      tpu.wait_dma2 semaphore(%124 : memref<!tpu.dma_semaphore, #tpu.memory_space<semaphore_mem>>) src(%121 : memref<1x128xf32, #tpu.memory_space<any>>) dst(%122 : memref<1x128xf32, #tpu.memory_space<vmem>>)
    } else {
    }
    %16 = arith.addi %0, %c1_i32 : i32
    %17 = arith.index_cast %16 : i32 to index
    %18 = memref.load %arg1[%17] : memref<8xi32, #tpu.memory_space<smem>>
    %c0_i32_7 = arith.constant 0 : i32
    %19 = tpu.memref_slice %arg2[%18, %c0_i32_7] : memref<11x128xf32, #tpu.memory_space<any>> -> memref<1x128xf32, #tpu.memory_space<any>>
    %c0_i32_8 = arith.constant 0 : i32
    %20 = tpu.memref_slice %arg3[%c1_i32, %c0_i32_8] : memref<8x128xf32, #tpu.memory_space<vmem>> -> memref<1x128xf32, #tpu.memory_space<vmem>>
    %21 = tpu.memref_slice %arg4[%12] : memref<8x!tpu.dma_semaphore, #tpu.memory_space<semaphore_mem>> -> memref<1x!tpu.dma_semaphore, #tpu.memory_space<semaphore_mem>>
    %22 = tpu.memref_squeeze %21 : memref<1x!tpu.dma_semaphore, #tpu.memory_space<semaphore_mem>> -> memref<!tpu.dma_semaphore, #tpu.memory_space<semaphore_mem>>
    tpu.enqueue_dma source(%19 : memref<1x128xf32, #tpu.memory_space<any>>) target(%20 : memref<1x128xf32, #tpu.memory_space<vmem>>) target_semaphore(%22 : memref<!tpu.dma_semaphore, #tpu.memory_space<semaphore_mem>>)
    %c2_i32 = arith.constant 2 : i32
    %c7_i32_9 = arith.constant 7 : i32
    %23 = arith.andi %c2_i32, %c7_i32_9 : i32
    %c8_i32_10 = arith.constant 8 : i32
    %24 = arith.cmpi sge, %c2_i32, %c8_i32_10 : i32
    %25 = arith.extui %24 : i1 to i32
    %c0_i32_11 = arith.constant 0 : i32
    %26 = arith.cmpi ne, %25, %c0_i32_11 : i32
    scf.if %26 {
      %c0_i32_82 = arith.constant 0 : i32
      %c0_i32_83 = arith.constant 0 : i32
      %121 = tpu.memref_slice %arg2[%c0_i32_82, %c0_i32_83] : memref<11x128xf32, #tpu.memory_space<any>> -> memref<1x128xf32, #tpu.memory_space<any>>
      %c0_i32_84 = arith.constant 0 : i32
      %c0_i32_85 = arith.constant 0 : i32
      %122 = tpu.memref_slice %arg3[%c0_i32_84, %c0_i32_85] : memref<8x128xf32, #tpu.memory_space<vmem>> -> memref<1x128xf32, #tpu.memory_space<vmem>>
      %123 = tpu.memref_slice %arg4[%23] : memref<8x!tpu.dma_semaphore, #tpu.memory_space<semaphore_mem>> -> memref<1x!tpu.dma_semaphore, #tpu.memory_space<semaphore_mem>>
      %124 = tpu.memref_squeeze %123 : memref<1x!tpu.dma_semaphore, #tpu.memory_space<semaphore_mem>> -> memref<!tpu.dma_semaphore, #tpu.memory_space<semaphore_mem>>
      tpu.wait_dma2 semaphore(%124 : memref<!tpu.dma_semaphore, #tpu.memory_space<semaphore_mem>>) src(%121 : memref<1x128xf32, #tpu.memory_space<any>>) dst(%122 : memref<1x128xf32, #tpu.memory_space<vmem>>)
    } else {
    }
    %27 = arith.addi %0, %c2_i32 : i32
    %28 = arith.index_cast %27 : i32 to index
    %29 = memref.load %arg1[%28] : memref<8xi32, #tpu.memory_space<smem>>
    %c0_i32_12 = arith.constant 0 : i32
    %30 = tpu.memref_slice %arg2[%29, %c0_i32_12] : memref<11x128xf32, #tpu.memory_space<any>> -> memref<1x128xf32, #tpu.memory_space<any>>
    %c0_i32_13 = arith.constant 0 : i32
    %31 = tpu.memref_slice %arg3[%c2_i32, %c0_i32_13] : memref<8x128xf32, #tpu.memory_space<vmem>> -> memref<1x128xf32, #tpu.memory_space<vmem>>
    %32 = tpu.memref_slice %arg4[%23] : memref<8x!tpu.dma_semaphore, #tpu.memory_space<semaphore_mem>> -> memref<1x!tpu.dma_semaphore, #tpu.memory_space<semaphore_mem>>
    %33 = tpu.memref_squeeze %32 : memref<1x!tpu.dma_semaphore, #tpu.memory_space<semaphore_mem>> -> memref<!tpu.dma_semaphore, #tpu.memory_space<semaphore_mem>>
    tpu.enqueue_dma source(%30 : memref<1x128xf32, #tpu.memory_space<any>>) target(%31 : memref<1x128xf32, #tpu.memory_space<vmem>>) target_semaphore(%33 : memref<!tpu.dma_semaphore, #tpu.memory_space<semaphore_mem>>)
    %c3_i32 = arith.constant 3 : i32
    %c7_i32_14 = arith.constant 7 : i32
    %34 = arith.andi %c3_i32, %c7_i32_14 : i32
    %c8_i32_15 = arith.constant 8 : i32
    %35 = arith.cmpi sge, %c3_i32, %c8_i32_15 : i32
    %36 = arith.extui %35 : i1 to i32
    %c0_i32_16 = arith.constant 0 : i32
    %37 = arith.cmpi ne, %36, %c0_i32_16 : i32
    scf.if %37 {
      %c0_i32_82 = arith.constant 0 : i32
      %c0_i32_83 = arith.constant 0 : i32
      %121 = tpu.memref_slice %arg2[%c0_i32_82, %c0_i32_83] : memref<11x128xf32, #tpu.memory_space<any>> -> memref<1x128xf32, #tpu.memory_space<any>>
      %c0_i32_84 = arith.constant 0 : i32
      %c0_i32_85 = arith.constant 0 : i32
      %122 = tpu.memref_slice %arg3[%c0_i32_84, %c0_i32_85] : memref<8x128xf32, #tpu.memory_space<vmem>> -> memref<1x128xf32, #tpu.memory_space<vmem>>
      %123 = tpu.memref_slice %arg4[%34] : memref<8x!tpu.dma_semaphore, #tpu.memory_space<semaphore_mem>> -> memref<1x!tpu.dma_semaphore, #tpu.memory_space<semaphore_mem>>
      %124 = tpu.memref_squeeze %123 : memref<1x!tpu.dma_semaphore, #tpu.memory_space<semaphore_mem>> -> memref<!tpu.dma_semaphore, #tpu.memory_space<semaphore_mem>>
      tpu.wait_dma2 semaphore(%124 : memref<!tpu.dma_semaphore, #tpu.memory_space<semaphore_mem>>) src(%121 : memref<1x128xf32, #tpu.memory_space<any>>) dst(%122 : memref<1x128xf32, #tpu.memory_space<vmem>>)
    } else {
    }
    %38 = arith.addi %0, %c3_i32 : i32
    %39 = arith.index_cast %38 : i32 to index
    %40 = memref.load %arg1[%39] : memref<8xi32, #tpu.memory_space<smem>>
    %c0_i32_17 = arith.constant 0 : i32
    %41 = tpu.memref_slice %arg2[%40, %c0_i32_17] : memref<11x128xf32, #tpu.memory_space<any>> -> memref<1x128xf32, #tpu.memory_space<any>>
    %c0_i32_18 = arith.constant 0 : i32
    %42 = tpu.memref_slice %arg3[%c3_i32, %c0_i32_18] : memref<8x128xf32, #tpu.memory_space<vmem>> -> memref<1x128xf32, #tpu.memory_space<vmem>>
    %43 = tpu.memref_slice %arg4[%34] : memref<8x!tpu.dma_semaphore, #tpu.memory_space<semaphore_mem>> -> memref<1x!tpu.dma_semaphore, #tpu.memory_space<semaphore_mem>>
    %44 = tpu.memref_squeeze %43 : memref<1x!tpu.dma_semaphore, #tpu.memory_space<semaphore_mem>> -> memref<!tpu.dma_semaphore, #tpu.memory_space<semaphore_mem>>
    tpu.enqueue_dma source(%41 : memref<1x128xf32, #tpu.memory_space<any>>) target(%42 : memref<1x128xf32, #tpu.memory_space<vmem>>) target_semaphore(%44 : memref<!tpu.dma_semaphore, #tpu.memory_space<semaphore_mem>>)
    %c4_i32 = arith.constant 4 : i32
    %c7_i32_19 = arith.constant 7 : i32
    %45 = arith.andi %c4_i32, %c7_i32_19 : i32
    %c8_i32_20 = arith.constant 8 : i32
    %46 = arith.cmpi sge, %c4_i32, %c8_i32_20 : i32
    %47 = arith.extui %46 : i1 to i32
    %c0_i32_21 = arith.constant 0 : i32
    %48 = arith.cmpi ne, %47, %c0_i32_21 : i32
    scf.if %48 {
      %c0_i32_82 = arith.constant 0 : i32
      %c0_i32_83 = arith.constant 0 : i32
      %121 = tpu.memref_slice %arg2[%c0_i32_82, %c0_i32_83] : memref<11x128xf32, #tpu.memory_space<any>> -> memref<1x128xf32, #tpu.memory_space<any>>
      %c0_i32_84 = arith.constant 0 : i32
      %c0_i32_85 = arith.constant 0 : i32
      %122 = tpu.memref_slice %arg3[%c0_i32_84, %c0_i32_85] : memref<8x128xf32, #tpu.memory_space<vmem>> -> memref<1x128xf32, #tpu.memory_space<vmem>>
      %123 = tpu.memref_slice %arg4[%45] : memref<8x!tpu.dma_semaphore, #tpu.memory_space<semaphore_mem>> -> memref<1x!tpu.dma_semaphore, #tpu.memory_space<semaphore_mem>>
      %124 = tpu.memref_squeeze %123 : memref<1x!tpu.dma_semaphore, #tpu.memory_space<semaphore_mem>> -> memref<!tpu.dma_semaphore, #tpu.memory_space<semaphore_mem>>
      tpu.wait_dma2 semaphore(%124 : memref<!tpu.dma_semaphore, #tpu.memory_space<semaphore_mem>>) src(%121 : memref<1x128xf32, #tpu.memory_space<any>>) dst(%122 : memref<1x128xf32, #tpu.memory_space<vmem>>)
    } else {
    }
    %49 = arith.addi %0, %c4_i32 : i32
    %50 = arith.index_cast %49 : i32 to index
    %51 = memref.load %arg1[%50] : memref<8xi32, #tpu.memory_space<smem>>
    %c0_i32_22 = arith.constant 0 : i32
    %52 = tpu.memref_slice %arg2[%51, %c0_i32_22] : memref<11x128xf32, #tpu.memory_space<any>> -> memref<1x128xf32, #tpu.memory_space<any>>
    %c0_i32_23 = arith.constant 0 : i32
    %53 = tpu.memref_slice %arg3[%c4_i32, %c0_i32_23] : memref<8x128xf32, #tpu.memory_space<vmem>> -> memref<1x128xf32, #tpu.memory_space<vmem>>
    %54 = tpu.memref_slice %arg4[%45] : memref<8x!tpu.dma_semaphore, #tpu.memory_space<semaphore_mem>> -> memref<1x!tpu.dma_semaphore, #tpu.memory_space<semaphore_mem>>
    %55 = tpu.memref_squeeze %54 : memref<1x!tpu.dma_semaphore, #tpu.memory_space<semaphore_mem>> -> memref<!tpu.dma_semaphore, #tpu.memory_space<semaphore_mem>>
    tpu.enqueue_dma source(%52 : memref<1x128xf32, #tpu.memory_space<any>>) target(%53 : memref<1x128xf32, #tpu.memory_space<vmem>>) target_semaphore(%55 : memref<!tpu.dma_semaphore, #tpu.memory_space<semaphore_mem>>)
    %c5_i32 = arith.constant 5 : i32
    %c7_i32_24 = arith.constant 7 : i32
    %56 = arith.andi %c5_i32, %c7_i32_24 : i32
    %c8_i32_25 = arith.constant 8 : i32
    %57 = arith.cmpi sge, %c5_i32, %c8_i32_25 : i32
    %58 = arith.extui %57 : i1 to i32
    %c0_i32_26 = arith.constant 0 : i32
    %59 = arith.cmpi ne, %58, %c0_i32_26 : i32
    scf.if %59 {
      %c0_i32_82 = arith.constant 0 : i32
      %c0_i32_83 = arith.constant 0 : i32
      %121 = tpu.memref_slice %arg2[%c0_i32_82, %c0_i32_83] : memref<11x128xf32, #tpu.memory_space<any>> -> memref<1x128xf32, #tpu.memory_space<any>>
      %c0_i32_84 = arith.constant 0 : i32
      %c0_i32_85 = arith.constant 0 : i32
      %122 = tpu.memref_slice %arg3[%c0_i32_84, %c0_i32_85] : memref<8x128xf32, #tpu.memory_space<vmem>> -> memref<1x128xf32, #tpu.memory_space<vmem>>
      %123 = tpu.memref_slice %arg4[%56] : memref<8x!tpu.dma_semaphore, #tpu.memory_space<semaphore_mem>> -> memref<1x!tpu.dma_semaphore, #tpu.memory_space<semaphore_mem>>
      %124 = tpu.memref_squeeze %123 : memref<1x!tpu.dma_semaphore, #tpu.memory_space<semaphore_mem>> -> memref<!tpu.dma_semaphore, #tpu.memory_space<semaphore_mem>>
      tpu.wait_dma2 semaphore(%124 : memref<!tpu.dma_semaphore, #tpu.memory_space<semaphore_mem>>) src(%121 : memref<1x128xf32, #tpu.memory_space<any>>) dst(%122 : memref<1x128xf32, #tpu.memory_space<vmem>>)
    } else {
    }
    %60 = arith.addi %0, %c5_i32 : i32
    %61 = arith.index_cast %60 : i32 to index
    %62 = memref.load %arg1[%61] : memref<8xi32, #tpu.memory_space<smem>>
    %c0_i32_27 = arith.constant 0 : i32
    %63 = tpu.memref_slice %arg2[%62, %c0_i32_27] : memref<11x128xf32, #tpu.memory_space<any>> -> memref<1x128xf32, #tpu.memory_space<any>>
    %c0_i32_28 = arith.constant 0 : i32
    %64 = tpu.memref_slice %arg3[%c5_i32, %c0_i32_28] : memref<8x128xf32, #tpu.memory_space<vmem>> -> memref<1x128xf32, #tpu.memory_space<vmem>>
    %65 = tpu.memref_slice %arg4[%56] : memref<8x!tpu.dma_semaphore, #tpu.memory_space<semaphore_mem>> -> memref<1x!tpu.dma_semaphore, #tpu.memory_space<semaphore_mem>>
    %66 = tpu.memref_squeeze %65 : memref<1x!tpu.dma_semaphore, #tpu.memory_space<semaphore_mem>> -> memref<!tpu.dma_semaphore, #tpu.memory_space<semaphore_mem>>
    tpu.enqueue_dma source(%63 : memref<1x128xf32, #tpu.memory_space<any>>) target(%64 : memref<1x128xf32, #tpu.memory_space<vmem>>) target_semaphore(%66 : memref<!tpu.dma_semaphore, #tpu.memory_space<semaphore_mem>>)
    %c6_i32 = arith.constant 6 : i32
    %c7_i32_29 = arith.constant 7 : i32
    %67 = arith.andi %c6_i32, %c7_i32_29 : i32
    %c8_i32_30 = arith.constant 8 : i32
    %68 = arith.cmpi sge, %c6_i32, %c8_i32_30 : i32
    %69 = arith.extui %68 : i1 to i32
    %c0_i32_31 = arith.constant 0 : i32
    %70 = arith.cmpi ne, %69, %c0_i32_31 : i32
    scf.if %70 {
      %c0_i32_82 = arith.constant 0 : i32
      %c0_i32_83 = arith.constant 0 : i32
      %121 = tpu.memref_slice %arg2[%c0_i32_82, %c0_i32_83] : memref<11x128xf32, #tpu.memory_space<any>> -> memref<1x128xf32, #tpu.memory_space<any>>
      %c0_i32_84 = arith.constant 0 : i32
      %c0_i32_85 = arith.constant 0 : i32
      %122 = tpu.memref_slice %arg3[%c0_i32_84, %c0_i32_85] : memref<8x128xf32, #tpu.memory_space<vmem>> -> memref<1x128xf32, #tpu.memory_space<vmem>>
      %123 = tpu.memref_slice %arg4[%67] : memref<8x!tpu.dma_semaphore, #tpu.memory_space<semaphore_mem>> -> memref<1x!tpu.dma_semaphore, #tpu.memory_space<semaphore_mem>>
      %124 = tpu.memref_squeeze %123 : memref<1x!tpu.dma_semaphore, #tpu.memory_space<semaphore_mem>> -> memref<!tpu.dma_semaphore, #tpu.memory_space<semaphore_mem>>
      tpu.wait_dma2 semaphore(%124 : memref<!tpu.dma_semaphore, #tpu.memory_space<semaphore_mem>>) src(%121 : memref<1x128xf32, #tpu.memory_space<any>>) dst(%122 : memref<1x128xf32, #tpu.memory_space<vmem>>)
    } else {
    }
    %71 = arith.addi %0, %c6_i32 : i32
    %72 = arith.index_cast %71 : i32 to index
    %73 = memref.load %arg1[%72] : memref<8xi32, #tpu.memory_space<smem>>
    %c0_i32_32 = arith.constant 0 : i32
    %74 = tpu.memref_slice %arg2[%73, %c0_i32_32] : memref<11x128xf32, #tpu.memory_space<any>> -> memref<1x128xf32, #tpu.memory_space<any>>
    %c0_i32_33 = arith.constant 0 : i32
    %75 = tpu.memref_slice %arg3[%c6_i32, %c0_i32_33] : memref<8x128xf32, #tpu.memory_space<vmem>> -> memref<1x128xf32, #tpu.memory_space<vmem>>
    %76 = tpu.memref_slice %arg4[%67] : memref<8x!tpu.dma_semaphore, #tpu.memory_space<semaphore_mem>> -> memref<1x!tpu.dma_semaphore, #tpu.memory_space<semaphore_mem>>
    %77 = tpu.memref_squeeze %76 : memref<1x!tpu.dma_semaphore, #tpu.memory_space<semaphore_mem>> -> memref<!tpu.dma_semaphore, #tpu.memory_space<semaphore_mem>>
    tpu.enqueue_dma source(%74 : memref<1x128xf32, #tpu.memory_space<any>>) target(%75 : memref<1x128xf32, #tpu.memory_space<vmem>>) target_semaphore(%77 : memref<!tpu.dma_semaphore, #tpu.memory_space<semaphore_mem>>)
    %c7_i32_34 = arith.constant 7 : i32
    %c7_i32_35 = arith.constant 7 : i32
    %78 = arith.andi %c7_i32_34, %c7_i32_35 : i32
    %c8_i32_36 = arith.constant 8 : i32
    %79 = arith.cmpi sge, %c7_i32_34, %c8_i32_36 : i32
    %80 = arith.extui %79 : i1 to i32
    %c0_i32_37 = arith.constant 0 : i32
    %81 = arith.cmpi ne, %80, %c0_i32_37 : i32
    scf.if %81 {
      %c0_i32_82 = arith.constant 0 : i32
      %c0_i32_83 = arith.constant 0 : i32
      %121 = tpu.memref_slice %arg2[%c0_i32_82, %c0_i32_83] : memref<11x128xf32, #tpu.memory_space<any>> -> memref<1x128xf32, #tpu.memory_space<any>>
      %c0_i32_84 = arith.constant 0 : i32
      %c0_i32_85 = arith.constant 0 : i32
      %122 = tpu.memref_slice %arg3[%c0_i32_84, %c0_i32_85] : memref<8x128xf32, #tpu.memory_space<vmem>> -> memref<1x128xf32, #tpu.memory_space<vmem>>
      %123 = tpu.memref_slice %arg4[%78] : memref<8x!tpu.dma_semaphore, #tpu.memory_space<semaphore_mem>> -> memref<1x!tpu.dma_semaphore, #tpu.memory_space<semaphore_mem>>
      %124 = tpu.memref_squeeze %123 : memref<1x!tpu.dma_semaphore, #tpu.memory_space<semaphore_mem>> -> memref<!tpu.dma_semaphore, #tpu.memory_space<semaphore_mem>>
      tpu.wait_dma2 semaphore(%124 : memref<!tpu.dma_semaphore, #tpu.memory_space<semaphore_mem>>) src(%121 : memref<1x128xf32, #tpu.memory_space<any>>) dst(%122 : memref<1x128xf32, #tpu.memory_space<vmem>>)
    } else {
    }
    %82 = arith.addi %0, %c7_i32_34 : i32
    %83 = arith.index_cast %82 : i32 to index
    %84 = memref.load %arg1[%83] : memref<8xi32, #tpu.memory_space<smem>>
    %c0_i32_38 = arith.constant 0 : i32
    %85 = tpu.memref_slice %arg2[%84, %c0_i32_38] : memref<11x128xf32, #tpu.memory_space<any>> -> memref<1x128xf32, #tpu.memory_space<any>>
    %c0_i32_39 = arith.constant 0 : i32
    %86 = tpu.memref_slice %arg3[%c7_i32_34, %c0_i32_39] : memref<8x128xf32, #tpu.memory_space<vmem>> -> memref<1x128xf32, #tpu.memory_space<vmem>>
    %87 = tpu.memref_slice %arg4[%78] : memref<8x!tpu.dma_semaphore, #tpu.memory_space<semaphore_mem>> -> memref<1x!tpu.dma_semaphore, #tpu.memory_space<semaphore_mem>>
    %88 = tpu.memref_squeeze %87 : memref<1x!tpu.dma_semaphore, #tpu.memory_space<semaphore_mem>> -> memref<!tpu.dma_semaphore, #tpu.memory_space<semaphore_mem>>
    tpu.enqueue_dma source(%85 : memref<1x128xf32, #tpu.memory_space<any>>) target(%86 : memref<1x128xf32, #tpu.memory_space<vmem>>) target_semaphore(%88 : memref<!tpu.dma_semaphore, #tpu.memory_space<semaphore_mem>>)
    %c8_i32_40 = arith.constant 8 : i32
    %c0_i32_41 = arith.constant 0 : i32
    %c0_i32_42 = arith.constant 0 : i32
    %c0_i32_43 = arith.constant 0 : i32
    %89 = tpu.memref_slice %arg2[%c0_i32_42, %c0_i32_43] : memref<11x128xf32, #tpu.memory_space<any>> -> memref<1x128xf32, #tpu.memory_space<any>>
    %c0_i32_44 = arith.constant 0 : i32
    %c0_i32_45 = arith.constant 0 : i32
    %90 = tpu.memref_slice %arg3[%c0_i32_44, %c0_i32_45] : memref<8x128xf32, #tpu.memory_space<vmem>> -> memref<1x128xf32, #tpu.memory_space<vmem>>
    %91 = tpu.memref_slice %arg4[%c0_i32_41] : memref<8x!tpu.dma_semaphore, #tpu.memory_space<semaphore_mem>> -> memref<1x!tpu.dma_semaphore, #tpu.memory_space<semaphore_mem>>
    %92 = tpu.memref_squeeze %91 : memref<1x!tpu.dma_semaphore, #tpu.memory_space<semaphore_mem>> -> memref<!tpu.dma_semaphore, #tpu.memory_space<semaphore_mem>>
    tpu.wait_dma2 semaphore(%92 : memref<!tpu.dma_semaphore, #tpu.memory_space<semaphore_mem>>) src(%89 : memref<1x128xf32, #tpu.memory_space<any>>) dst(%90 : memref<1x128xf32, #tpu.memory_space<vmem>>)
    %c1_i32_46 = arith.constant 1 : i32
    %c0_i32_47 = arith.constant 0 : i32
    %c0_i32_48 = arith.constant 0 : i32
    %93 = tpu.memref_slice %arg2[%c0_i32_47, %c0_i32_48] : memref<11x128xf32, #tpu.memory_space<any>> -> memref<1x128xf32, #tpu.memory_space<any>>
    %c0_i32_49 = arith.constant 0 : i32
    %c0_i32_50 = arith.constant 0 : i32
    %94 = tpu.memref_slice %arg3[%c0_i32_49, %c0_i32_50] : memref<8x128xf32, #tpu.memory_space<vmem>> -> memref<1x128xf32, #tpu.memory_space<vmem>>
    %95 = tpu.memref_slice %arg4[%c1_i32_46] : memref<8x!tpu.dma_semaphore, #tpu.memory_space<semaphore_mem>> -> memref<1x!tpu.dma_semaphore, #tpu.memory_space<semaphore_mem>>
    %96 = tpu.memref_squeeze %95 : memref<1x!tpu.dma_semaphore, #tpu.memory_space<semaphore_mem>> -> memref<!tpu.dma_semaphore, #tpu.memory_space<semaphore_mem>>
    tpu.wait_dma2 semaphore(%96 : memref<!tpu.dma_semaphore, #tpu.memory_space<semaphore_mem>>) src(%93 : memref<1x128xf32, #tpu.memory_space<any>>) dst(%94 : memref<1x128xf32, #tpu.memory_space<vmem>>)
    %c2_i32_51 = arith.constant 2 : i32
    %c0_i32_52 = arith.constant 0 : i32
    %c0_i32_53 = arith.constant 0 : i32
    %97 = tpu.memref_slice %arg2[%c0_i32_52, %c0_i32_53] : memref<11x128xf32, #tpu.memory_space<any>> -> memref<1x128xf32, #tpu.memory_space<any>>
    %c0_i32_54 = arith.constant 0 : i32
    %c0_i32_55 = arith.constant 0 : i32
    %98 = tpu.memref_slice %arg3[%c0_i32_54, %c0_i32_55] : memref<8x128xf32, #tpu.memory_space<vmem>> -> memref<1x128xf32, #tpu.memory_space<vmem>>
    %99 = tpu.memref_slice %arg4[%c2_i32_51] : memref<8x!tpu.dma_semaphore, #tpu.memory_space<semaphore_mem>> -> memref<1x!tpu.dma_semaphore, #tpu.memory_space<semaphore_mem>>
    %100 = tpu.memref_squeeze %99 : memref<1x!tpu.dma_semaphore, #tpu.memory_space<semaphore_mem>> -> memref<!tpu.dma_semaphore, #tpu.memory_space<semaphore_mem>>
    tpu.wait_dma2 semaphore(%100 : memref<!tpu.dma_semaphore, #tpu.memory_space<semaphore_mem>>) src(%97 : memref<1x128xf32, #tpu.memory_space<any>>) dst(%98 : memref<1x128xf32, #tpu.memory_space<vmem>>)
    %c3_i32_56 = arith.constant 3 : i32
    %c0_i32_57 = arith.constant 0 : i32
    %c0_i32_58 = arith.constant 0 : i32
    %101 = tpu.memref_slice %arg2[%c0_i32_57, %c0_i32_58] : memref<11x128xf32, #tpu.memory_space<any>> -> memref<1x128xf32, #tpu.memory_space<any>>
    %c0_i32_59 = arith.constant 0 : i32
    %c0_i32_60 = arith.constant 0 : i32
    %102 = tpu.memref_slice %arg3[%c0_i32_59, %c0_i32_60] : memref<8x128xf32, #tpu.memory_space<vmem>> -> memref<1x128xf32, #tpu.memory_space<vmem>>
    %103 = tpu.memref_slice %arg4[%c3_i32_56] : memref<8x!tpu.dma_semaphore, #tpu.memory_space<semaphore_mem>> -> memref<1x!tpu.dma_semaphore, #tpu.memory_space<semaphore_mem>>
    %104 = tpu.memref_squeeze %103 : memref<1x!tpu.dma_semaphore, #tpu.memory_space<semaphore_mem>> -> memref<!tpu.dma_semaphore, #tpu.memory_space<semaphore_mem>>
    tpu.wait_dma2 semaphore(%104 : memref<!tpu.dma_semaphore, #tpu.memory_space<semaphore_mem>>) src(%101 : memref<1x128xf32, #tpu.memory_space<any>>) dst(%102 : memref<1x128xf32, #tpu.memory_space<vmem>>)
    %c4_i32_61 = arith.constant 4 : i32
    %c0_i32_62 = arith.constant 0 : i32
    %c0_i32_63 = arith.constant 0 : i32
    %105 = tpu.memref_slice %arg2[%c0_i32_62, %c0_i32_63] : memref<11x128xf32, #tpu.memory_space<any>> -> memref<1x128xf32, #tpu.memory_space<any>>
    %c0_i32_64 = arith.constant 0 : i32
    %c0_i32_65 = arith.constant 0 : i32
    %106 = tpu.memref_slice %arg3[%c0_i32_64, %c0_i32_65] : memref<8x128xf32, #tpu.memory_space<vmem>> -> memref<1x128xf32, #tpu.memory_space<vmem>>
    %107 = tpu.memref_slice %arg4[%c4_i32_61] : memref<8x!tpu.dma_semaphore, #tpu.memory_space<semaphore_mem>> -> memref<1x!tpu.dma_semaphore, #tpu.memory_space<semaphore_mem>>
    %108 = tpu.memref_squeeze %107 : memref<1x!tpu.dma_semaphore, #tpu.memory_space<semaphore_mem>> -> memref<!tpu.dma_semaphore, #tpu.memory_space<semaphore_mem>>
    tpu.wait_dma2 semaphore(%108 : memref<!tpu.dma_semaphore, #tpu.memory_space<semaphore_mem>>) src(%105 : memref<1x128xf32, #tpu.memory_space<any>>) dst(%106 : memref<1x128xf32, #tpu.memory_space<vmem>>)
    %c5_i32_66 = arith.constant 5 : i32
    %c0_i32_67 = arith.constant 0 : i32
    %c0_i32_68 = arith.constant 0 : i32
    %109 = tpu.memref_slice %arg2[%c0_i32_67, %c0_i32_68] : memref<11x128xf32, #tpu.memory_space<any>> -> memref<1x128xf32, #tpu.memory_space<any>>
    %c0_i32_69 = arith.constant 0 : i32
    %c0_i32_70 = arith.constant 0 : i32
    %110 = tpu.memref_slice %arg3[%c0_i32_69, %c0_i32_70] : memref<8x128xf32, #tpu.memory_space<vmem>> -> memref<1x128xf32, #tpu.memory_space<vmem>>
    %111 = tpu.memref_slice %arg4[%c5_i32_66] : memref<8x!tpu.dma_semaphore, #tpu.memory_space<semaphore_mem>> -> memref<1x!tpu.dma_semaphore, #tpu.memory_space<semaphore_mem>>
    %112 = tpu.memref_squeeze %111 : memref<1x!tpu.dma_semaphore, #tpu.memory_space<semaphore_mem>> -> memref<!tpu.dma_semaphore, #tpu.memory_space<semaphore_mem>>
    tpu.wait_dma2 semaphore(%112 : memref<!tpu.dma_semaphore, #tpu.memory_space<semaphore_mem>>) src(%109 : memref<1x128xf32, #tpu.memory_space<any>>) dst(%110 : memref<1x128xf32, #tpu.memory_space<vmem>>)
    %c6_i32_71 = arith.constant 6 : i32
    %c0_i32_72 = arith.constant 0 : i32
    %c0_i32_73 = arith.constant 0 : i32
    %113 = tpu.memref_slice %arg2[%c0_i32_72, %c0_i32_73] : memref<11x128xf32, #tpu.memory_space<any>> -> memref<1x128xf32, #tpu.memory_space<any>>
    %c0_i32_74 = arith.constant 0 : i32
    %c0_i32_75 = arith.constant 0 : i32
    %114 = tpu.memref_slice %arg3[%c0_i32_74, %c0_i32_75] : memref<8x128xf32, #tpu.memory_space<vmem>> -> memref<1x128xf32, #tpu.memory_space<vmem>>
    %115 = tpu.memref_slice %arg4[%c6_i32_71] : memref<8x!tpu.dma_semaphore, #tpu.memory_space<semaphore_mem>> -> memref<1x!tpu.dma_semaphore, #tpu.memory_space<semaphore_mem>>
    %116 = tpu.memref_squeeze %115 : memref<1x!tpu.dma_semaphore, #tpu.memory_space<semaphore_mem>> -> memref<!tpu.dma_semaphore, #tpu.memory_space<semaphore_mem>>
    tpu.wait_dma2 semaphore(%116 : memref<!tpu.dma_semaphore, #tpu.memory_space<semaphore_mem>>) src(%113 : memref<1x128xf32, #tpu.memory_space<any>>) dst(%114 : memref<1x128xf32, #tpu.memory_space<vmem>>)
    %c7_i32_76 = arith.constant 7 : i32
    %c0_i32_77 = arith.constant 0 : i32
    %c0_i32_78 = arith.constant 0 : i32
    %117 = tpu.memref_slice %arg2[%c0_i32_77, %c0_i32_78] : memref<11x128xf32, #tpu.memory_space<any>> -> memref<1x128xf32, #tpu.memory_space<any>>
    %c0_i32_79 = arith.constant 0 : i32
    %c0_i32_80 = arith.constant 0 : i32
    %118 = tpu.memref_slice %arg3[%c0_i32_79, %c0_i32_80] : memref<8x128xf32, #tpu.memory_space<vmem>> -> memref<1x128xf32, #tpu.memory_space<vmem>>
    %119 = tpu.memref_slice %arg4[%c7_i32_76] : memref<8x!tpu.dma_semaphore, #tpu.memory_space<semaphore_mem>> -> memref<1x!tpu.dma_semaphore, #tpu.memory_space<semaphore_mem>>
    %120 = tpu.memref_squeeze %119 : memref<1x!tpu.dma_semaphore, #tpu.memory_space<semaphore_mem>> -> memref<!tpu.dma_semaphore, #tpu.memory_space<semaphore_mem>>
    tpu.wait_dma2 semaphore(%120 : memref<!tpu.dma_semaphore, #tpu.memory_space<semaphore_mem>>) src(%117 : memref<1x128xf32, #tpu.memory_space<any>>) dst(%118 : memref<1x128xf32, #tpu.memory_space<vmem>>)
    %c8_i32_81 = arith.constant 8 : i32
    return
  }
  func.func @transform_0(%arg0: i32) -> i32 {
    %c0_i32 = arith.constant 0 : i32
    %c0_i32_0 = arith.constant 0 : i32
    return %c0_i32 : i32
  }
  func.func @transform_2(%arg0: i32) -> (i32, i32) {
    %c0_i32 = arith.constant 0 : i32
    %c0_i32_0 = arith.constant 0 : i32
    return %arg0, %c0_i32 : i32, i32
  }
}

</mosaic_0001>

<llo_original>
// kernel: tpu_custom_call.1
$region0: #{tpu_custom_call.1}
  #allocation0 [shape = 'u32[]', space=smem, size = 0x4, offset = 0x4, fixed_abs, tag = 'smem constant byte address 0x4 - core index']
  #allocation1 [shape = 'u32[144,128]{1,0:T(1,128)}', space=vmem, size = 0x12000, scoped, tag = 'internal scratch']
  #allocation2 [shape = 's32[8]{0}', space=sflag, size = 0x20, scoped, tag = 'scratch operand']
  #allocation7 [shape = 's32[]', space=sflag, size = 0x4, offset = 0, fixed_abs, tag = 'sflag constant byte address 0x0 - dummy sync flag']
  #allocation8 [shape = 's32[]', space=sflag, size = 0x4, offset = 0, fixed_abs, tag = 'sflag constant byte address 0x0 - dummy sync flag']
  #allocation9 [shape = 'u32[]', space=smem, size = 0x4, offset = 0x44, fixed_abs, tag = 'smem constant byte address 0x44 - assertion arg 0']
  #allocation10 [shape = 'u32[]', space=smem, size = 0x4, offset = 0x48, fixed_abs, tag = 'smem constant byte address 0x48 - assertion arg 1']
  #allocation11 [shape = 's32[]', space=sflag, size = 0x4, offset = 0, fixed_abs, tag = 'sflag constant byte address 0x0 - dummy sync flag']
  #allocation12 [shape = 's32[]', space=sflag, size = 0x4, offset = 0, fixed_abs, tag = 'sflag constant byte address 0x0 - dummy sync flag']
  #allocation13 [shape = 's32[]', space=sflag, size = 0x4, offset = 0, fixed_abs, tag = 'sflag constant byte address 0x0 - dummy sync flag']
  #allocation14 [shape = 's32[]', space=sflag, size = 0x4, offset = 0, fixed_abs, tag = 'sflag constant byte address 0x0 - dummy sync flag']
  #allocation15 [shape = 's32[]', space=sflag, size = 0x4, offset = 0, fixed_abs, tag = 'sflag constant byte address 0x0 - dummy sync flag']
  #allocation16 [shape = 's32[]', space=sflag, size = 0x4, offset = 0, fixed_abs, tag = 'sflag constant byte address 0x0 - dummy sync flag']
  #allocation17 [shape = 's32[]', space=sflag, size = 0x4, offset = 0, fixed_abs, tag = 'sflag constant byte address 0x0 - dummy sync flag']
  #allocation18 [shape = 's32[]', space=sflag, size = 0x4, offset = 0, fixed_abs, tag = 'sflag constant byte address 0x0 - dummy sync flag']
  #allocation19 [shape = 's32[]', space=sflag, size = 0x4, offset = 0, fixed_abs, tag = 'sflag constant byte address 0x0 - dummy sync flag']
  #allocation20 [shape = 's32[]', space=sflag, size = 0x4, offset = 0, fixed_abs, tag = 'sflag constant byte address 0x0 - dummy sync flag']
  #allocation21 [shape = 's32[]', space=sflag, size = 0x4, offset = 0, fixed_abs, tag = 'sflag constant byte address 0x0 - dummy sync flag']
  #allocation22 [shape = 's32[]', space=sflag, size = 0x4, offset = 0, fixed_abs, tag = 'sflag constant byte address 0x0 - dummy sync flag']
  #allocation23 [shape = 's32[]', space=sflag, size = 0x4, offset = 0, fixed_abs, tag = 'sflag constant byte address 0x0 - dummy sync flag']
  #allocation24 [shape = 's32[]', space=sflag, size = 0x4, offset = 0, fixed_abs, tag = 'sflag constant byte address 0x0 - dummy sync flag']
  %s0 = inlined_call_operand.hbm [shape: s32[8], index: 0, kind: input, shape index: {}]
  %s1 = inlined_call_operand.hbm [shape: f32[11,128], index: 1, kind: input, shape index: {}]
  %s2 = inlined_call_operand.hbm [shape: f32[8,128], index: 2, kind: output, shape index: {}]
  %s3 = sld [smem:[#allocation0]]
  $region50: #{tpu_custom_call.1} parent=0
    _
  %s5 = ssub.s32 1, %s3
  %s6 = scalar_select 0, %s5, %s3
  $region1: #{tpu_custom_call.1} parent=0
    #allocation3 [shape = 'u8[512]{0}', space=smem, size = 0x200, scoped, tag = 'input window, operand 0, single buffered']
    #allocation4 [shape = 's32[1]{0}', space=sflag, size = 0x4, scoped, tag = 'scoped memory for tpu_custom_call.1']
    #allocation5 [shape = 's32[1]{0}', space=sflag, size = 0x4, scoped, tag = 'scoped memory for tpu_custom_call.1']
    #allocation6 [shape = 'u8[4096]{0}', space=vmem, size = 0x1000, scoped, tag = 'output window, operand 0, single buffered']
    %7 = vsyncpa [#allocation5], 0
    %8 = vsyncpa [#allocation4], 0
    // Predicated region
    $region2: #{tpu_custom_call.1} parent=1 // pred_check
      _
    $region3: #{tpu_custom_call.1} parent=1 // pred_check_branch
      %10 = sbr.rel (0) target = $region5
    $region4: #{tpu_custom_call.1} parent=1 // pred_region
      %s12 = ssub.s32 16, 16
      %13 = vsyncadd [#allocation5], %s12
      %16 = dma.hbm_to_smem %s0, 16, [#allocation3], [#allocation5]
    $region5: #{tpu_custom_call.1} parent=1 // pred_fallthru
      _
    // Predicated region
    $region6: #{tpu_custom_call.1} parent=1 // pred_check
      _
    $region7: #{tpu_custom_call.1} parent=1 // pred_check_branch
      %18 = sbr.rel (0) target = $region9
    $region8: #{tpu_custom_call.1} parent=1 // pred_region
      %19 = dma.done [#allocation5], 16
    $region9: #{tpu_custom_call.1} parent=1 // pred_fallthru
      _
    %20 = sfence
    %s21 = smul.u32 0, 8
    %s22 = sld [smem:[#allocation3 + %s21]]
    %s23 = smul.addr %s22, 16
    %s24 = scalar_lea.hbm %s1, %s23
    // Predicated region
    $region10: #{tpu_custom_call.1} parent=1 // pred_check
      _
    $region11: #{tpu_custom_call.1} parent=1 // pred_check_branch
      %26 = sbr.rel target = $region13
    $region12: #{tpu_custom_call.1} parent=1 // pred_region
      %27 = sst [smem:[#allocation9]] [#allocation8]
      %28 = sst [smem:[#allocation10]] [#allocation7]
    $region13: #{tpu_custom_call.1} parent=1 // pred_fallthru
      _
    %30 = shalt.err (0)
    %s32 = sshll.u32 [#allocation6], 4
    %s33 = int_to_ptr.vmem [resolvable:$true] %s32
    %35 = dma.hbm_to_vmem [thread:$0]  %s24, 16, %s33, [#allocation2]
    %s36 = sadd.s32 %s21, 1
    %s37 = sld [smem:[#allocation3 + %s36]]
    %s38 = smul.addr %s37, 16
    %s39 = scalar_lea.hbm %s1, %s38
    %s40 = scalar_lea.vmem [#allocation6], 1
    %s41 = scalar_lea.sflag [#allocation2], 1
    // Predicated region
    $region14: #{tpu_custom_call.1} parent=1 // pred_check
      _
    $region15: #{tpu_custom_call.1} parent=1 // pred_check_branch
      %43 = sbr.rel target = $region17
    $region16: #{tpu_custom_call.1} parent=1 // pred_region
      %44 = sst [smem:[#allocation9]] [#allocation12]
      %45 = sst [smem:[#allocation10]] [#allocation11]
    $region17: #{tpu_custom_call.1} parent=1 // pred_fallthru
      _
    %47 = shalt.err (0)
    %s49 = sshll.u32 %s40, 4
    %s50 = int_to_ptr.vmem [resolvable:$true] %s49
    %52 = dma.hbm_to_vmem [thread:$0]  %s39, 16, %s50, %s41
    %s53 = sadd.s32 %s21, 2
    %s54 = sld [smem:[#allocation3 + %s53]]
    %s55 = smul.addr %s54, 16
    %s56 = scalar_lea.hbm %s1, %s55
    %s57 = scalar_lea.vmem [#allocation6], 2
    %s58 = scalar_lea.sflag [#allocation2], 2
    // Predicated region
    $region18: #{tpu_custom_call.1} parent=1 // pred_check
      _
    $region19: #{tpu_custom_call.1} parent=1 // pred_check_branch
      %60 = sbr.rel target = $region21
    $region20: #{tpu_custom_call.1} parent=1 // pred_region
      %61 = sst [smem:[#allocation9]] [#allocation14]
      %62 = sst [smem:[#allocation10]] [#allocation13]
    $region21: #{tpu_custom_call.1} parent=1 // pred_fallthru
      _
    %64 = shalt.err (0)
    %s66 = sshll.u32 %s57, 4
    %s67 = int_to_ptr.vmem [resolvable:$true] %s66
    %69 = dma.hbm_to_vmem [thread:$0]  %s56, 16, %s67, %s58
    %s70 = sadd.s32 %s21, 3
    %s71 = sld [smem:[#allocation3 + %s70]]
    %s72 = smul.addr %s71, 16
    %s73 = scalar_lea.hbm %s1, %s72
    %s74 = scalar_lea.vmem [#allocation6], 3
    %s75 = scalar_lea.sflag [#allocation2], 3
    // Predicated region
    $region22: #{tpu_custom_call.1} parent=1 // pred_check
      _
    $region23: #{tpu_custom_call.1} parent=1 // pred_check_branch
      %77 = sbr.rel target = $region25
    $region24: #{tpu_custom_call.1} parent=1 // pred_region
      %78 = sst [smem:[#allocation9]] [#allocation16]
      %79 = sst [smem:[#allocation10]] [#allocation15]
    $region25: #{tpu_custom_call.1} parent=1 // pred_fallthru
      _
    %81 = shalt.err (0)
    %s83 = sshll.u32 %s74, 4
    %s84 = int_to_ptr.vmem [resolvable:$true] %s83
    %86 = dma.hbm_to_vmem [thread:$0]  %s73, 16, %s84, %s75
    %s87 = sadd.s32 %s21, 4
    %s88 = sld [smem:[#allocation3 + %s87]]
    %s89 = smul.addr %s88, 16
    %s90 = scalar_lea.hbm %s1, %s89
    %s91 = scalar_lea.vmem [#allocation6], 4
    %s92 = scalar_lea.sflag [#allocation2], 4
    // Predicated region
    $region26: #{tpu_custom_call.1} parent=1 // pred_check
      _
    $region27: #{tpu_custom_call.1} parent=1 // pred_check_branch
      %94 = sbr.rel target = $region29
    $region28: #{tpu_custom_call.1} parent=1 // pred_region
      %95 = sst [smem:[#allocation9]] [#allocation18]
      %96 = sst [smem:[#allocation10]] [#allocation17]
    $region29: #{tpu_custom_call.1} parent=1 // pred_fallthru
      _
    %98 = shalt.err (0)
    %s100 = sshll.u32 %s91, 4
    %s101 = int_to_ptr.vmem [resolvable:$true] %s100
    %103 = dma.hbm_to_vmem [thread:$0]  %s90, 16, %s101, %s92
    %s104 = sadd.s32 %s21, 5
    %s105 = sld [smem:[#allocation3 + %s104]]
    %s106 = smul.addr %s105, 16
    %s107 = scalar_lea.hbm %s1, %s106
    %s108 = scalar_lea.vmem [#allocation6], 5
    %s109 = scalar_lea.sflag [#allocation2], 5
    // Predicated region
    $region30: #{tpu_custom_call.1} parent=1 // pred_check
      _
    $region31: #{tpu_custom_call.1} parent=1 // pred_check_branch
      %111 = sbr.rel target = $region33
    $region32: #{tpu_custom_call.1} parent=1 // pred_region
      %112 = sst [smem:[#allocation9]] [#allocation20]
      %113 = sst [smem:[#allocation10]] [#allocation19]
    $region33: #{tpu_custom_call.1} parent=1 // pred_fallthru
      _
    %115 = shalt.err (0)
    %s117 = sshll.u32 %s108, 4
    %s118 = int_to_ptr.vmem [resolvable:$true] %s117
    %120 = dma.hbm_to_vmem [thread:$0]  %s107, 16, %s118, %s109
    %s121 = sadd.s32 %s21, 6
    %s122 = sld [smem:[#allocation3 + %s121]]
    %s123 = smul.addr %s122, 16
    %s124 = scalar_lea.hbm %s1, %s123
    %s125 = scalar_lea.vmem [#allocation6], 6
    %s126 = scalar_lea.sflag [#allocation2], 6
    // Predicated region
    $region34: #{tpu_custom_call.1} parent=1 // pred_check
      _
    $region35: #{tpu_custom_call.1} parent=1 // pred_check_branch
      %128 = sbr.rel target = $region37
    $region36: #{tpu_custom_call.1} parent=1 // pred_region
      %129 = sst [smem:[#allocation9]] [#allocation22]
      %130 = sst [smem:[#allocation10]] [#allocation21]
    $region37: #{tpu_custom_call.1} parent=1 // pred_fallthru
      _
    %132 = shalt.err (0)
    %s134 = sshll.u32 %s125, 4
    %s135 = int_to_ptr.vmem [resolvable:$true] %s134
    %137 = dma.hbm_to_vmem [thread:$0]  %s124, 16, %s135, %s126
    %s138 = sadd.s32 %s21, 7
    %s139 = sld [smem:[#allocation3 + %s138]]
    %s140 = smul.addr %s139, 16
    %s141 = scalar_lea.hbm %s1, %s140
    %s142 = scalar_lea.vmem [#allocation6], 7
    %s143 = scalar_lea.sflag [#allocation2], 7
    // Predicated region
    $region38: #{tpu_custom_call.1} parent=1 // pred_check
      _
    $region39: #{tpu_custom_call.1} parent=1 // pred_check_branch
      %145 = sbr.rel target = $region41
    $region40: #{tpu_custom_call.1} parent=1 // pred_region
      %146 = sst [smem:[#allocation9]] [#allocation24]
      %147 = sst [smem:[#allocation10]] [#allocation23]
    $region41: #{tpu_custom_call.1} parent=1 // pred_fallthru
      _
    %149 = shalt.err (0)
    %s151 = sshll.u32 %s142, 4
    %s152 = int_to_ptr.vmem [resolvable:$true] %s151
    %154 = dma.hbm_to_vmem [thread:$0]  %s141, 16, %s152, %s143
    %s155 = smul.u32 1, 1
    %s156 = sshll.u32 %s155, 4
    %157 = dma.done [#allocation2], %s156
    %s158 = sshll.u32 %s155, 4
    %159 = dma.done %s41, %s158
    %s160 = sshll.u32 %s155, 4
    %161 = dma.done %s58, %s160
    %s162 = sshll.u32 %s155, 4
    %163 = dma.done %s75, %s162
    %s164 = sshll.u32 %s155, 4
    %165 = dma.done %s92, %s164
    %s166 = sshll.u32 %s155, 4
    %167 = dma.done %s109, %s166
    %s168 = sshll.u32 %s155, 4
    %169 = dma.done %s126, %s168
    %s170 = sshll.u32 %s155, 4
    %171 = dma.done %s143, %s170
    // Predicated region
    $region42: #{tpu_custom_call.1} parent=1 // pred_check
      _
    $region43: #{tpu_custom_call.1} parent=1 // pred_check_branch
      %173 = sbr.rel (0) target = $region45
    $region44: #{tpu_custom_call.1} parent=1 // pred_region
      %s175 = ssub.s32 128, 128
      %176 = vsyncadd [#allocation4], %s175
      %s178 = sshll.u32 [#allocation6], 4
      %s179 = int_to_ptr.vmem [resolvable:$true] %s178
      %181 = dma.vmem_to_hbm [thread:$0]  %s179, 128, %s2, [#allocation4]
    $region45: #{tpu_custom_call.1} parent=1 // pred_fallthru
      _
    // Predicated region
    $region46: #{tpu_custom_call.1} parent=1 // pred_check
      _
    $region47: #{tpu_custom_call.1} parent=1 // pred_check_branch
      %183 = sbr.rel (0) target = $region49
    $region48: #{tpu_custom_call.1} parent=1 // pred_region
      %184 = dma.done [#allocation4], 128
    $region49: #{tpu_custom_call.1} parent=1 // pred_fallthru
      _
    %185 = vsyncpa [#allocation4], 1
    %186 = vsyncpa [#allocation5], 1
  %187 = vsyncmov [#allocation2]
  %s188 = vpop.sfrf %187
  %p189 = scmp.eq.s32.totalorder %s188, 0
  %p190 = pneg %p189
  %192 = shalt.err (%p190)
  %s193 = scalar_lea.sflag [#allocation2], 1
  %194 = vsyncmov %s193
  %s195 = vpop.sfrf %194
  %p196 = scmp.eq.s32.totalorder %s195, 0
  %p197 = pneg %p196
  %199 = shalt.err (%p197)
  %s200 = scalar_lea.sflag [#allocation2], 2
  %201 = vsyncmov %s200
  %s202 = vpop.sfrf %201
  %p203 = scmp.eq.s32.totalorder %s202, 0
  %p204 = pneg %p203
  %206 = shalt.err (%p204)
  %s207 = scalar_lea.sflag [#allocation2], 3
  %208 = vsyncmov %s207
  %s209 = vpop.sfrf %208
  %p210 = scmp.eq.s32.totalorder %s209, 0
  %p211 = pneg %p210
  %213 = shalt.err (%p211)
  %s214 = scalar_lea.sflag [#allocation2], 4
  %215 = vsyncmov %s214
  %s216 = vpop.sfrf %215
  %p217 = scmp.eq.s32.totalorder %s216, 0
  %p218 = pneg %p217
  %220 = shalt.err (%p218)
  %s221 = scalar_lea.sflag [#allocation2], 5
  %222 = vsyncmov %s221
  %s223 = vpop.sfrf %222
  %p224 = scmp.eq.s32.totalorder %s223, 0
  %p225 = pneg %p224
  %227 = shalt.err (%p225)
  %s228 = scalar_lea.sflag [#allocation2], 6
  %229 = vsyncmov %s228
  %s230 = vpop.sfrf %229
  %p231 = scmp.eq.s32.totalorder %s230, 0
  %p232 = pneg %p231
  %234 = shalt.err (%p232)
  %s235 = scalar_lea.sflag [#allocation2], 7
  %236 = vsyncmov %s235
  %s237 = vpop.sfrf %236
  %p238 = scmp.eq.s32.totalorder %s237, 0
  %p239 = pneg %p238
  %241 = shalt.err (%p239)

</llo_original>
